<compile_context>
chip_gen: v7x
topology: tpu7x:2x2x1
jax: 0.10.0
libtpu: 0.0.40
codegen_flags: <defaults>
</compile_context>

<pallas_src>
import functools

import jax
import jax.numpy as jnp
from jax.experimental import pallas as pl
from jax.experimental.pallas import tpu as pltpu

LANES = 128
MAX_ROW_TILE = 2048  # 2048x128 f32 = 1 MiB per input block


def _cdiv(a, b):
    return (a + b - 1) // b


def _round_up(a, m):
    return _cdiv(a, m) * m


def _focal_sum_kernel(x_ref, t_ref, out_ref, *, row_tile, n_inner, rows_valid,
                      needs_mask, gamma, eps):
    """Elementwise focal loss + per-tile partial-sum accumulation.

    x_ref   : (row_tile, LANES) logits tile (native dtype)
    t_ref   : (row_tile, LANES) targets tile (native dtype)
    out_ref : (8, LANES) f32 resident accumulator block (one per outer grid index)
    """
    c = pl.program_id(0)  # "parallel" axis -> sharded across TensorCores on v7x
    i = pl.program_id(1)  # "arbitrary" reduction axis

    @pl.when(i == 0)
    def _init():
        out_ref[...] = jnp.zeros_like(out_ref)

    x = x_ref[...].astype(jnp.float32)
    t = t_ref[...].astype(jnp.float32)

    prob = jax.nn.sigmoid(x)          # == exp(logsigmoid(x)) up to rounding
    one_m_p = 1.0 - prob

    if gamma == 2.0:
        # Explicit squares keep this on the VALU instead of exp(g*log(x)) on the EUP.
        pos_w = one_m_p * one_m_p
        neg_w = prob * prob
    else:
        pos_w = jnp.power(one_m_p, gamma)
        neg_w = jnp.power(prob, gamma)

    focal = -(t * jnp.log(prob + eps) * pos_w
              + (1.0 - t) * jnp.log(one_m_p + eps) * neg_w)

    def _accumulate(vals):
        # Collapse the whole tile to one (1, LANES) row; the tiny RMW touches a
        # single vreg of the resident output block.
        out_ref[0:1, :] += jnp.sum(vals, axis=0, keepdims=True)

    if needs_mask:
        base_row = (c * n_inner + i) * row_tile
        is_boundary = base_row + row_tile > rows_valid

        @pl.when(is_boundary)
        def _edge():
            # Row-granular mask (main slab is 128-aligned); scalar threshold keeps
            # the vector-side iota grid-invariant and overflow-free.
            thresh = rows_valid - base_row
            row_ids = jax.lax.broadcasted_iota(jnp.int32, (row_tile, LANES), 0)
            # Select (not multiply) so garbage/NaN in the unfetched tail never
            # propagates into the sum.
            _accumulate(jnp.where(row_ids < thresh, focal, 0.0))

        @pl.when(jnp.logical_not(is_boundary))
        def _interior():
            _accumulate(focal)
    else:
        _accumulate(focal)


def binary_focal_loss(logits, targets, gamma=2.0, reduction="mean", eps=1e-10):
    """JAX/Pallas equivalent of BinaryFocalLoss.forward (reduction: 'mean'/'sum')."""
    assert logits.shape == targets.shape
    if reduction not in ("mean", "sum"):
        # TODO(synk): reduction='None' (per-element focal map) is not wired through
        # the scalar-reduction kernel; only 'mean'/'sum' are supported here.
        raise NotImplementedError(f"Invalid reduction mode: {reduction}")

    n_valid = int(logits.size)
    x_flat = jnp.ravel(logits)
    t_flat = jnp.ravel(targets)

    rows = n_valid // LANES
    n_main = rows * LANES

    total = jnp.zeros((), jnp.float32)
    tail_start = 0

    if rows >= 8:
        # Prefer an even tile count so the 2-way TensorCore split never creates a
        # phantom (fully out-of-bounds) tile.
        n_tiles_pref = _cdiv(rows, MAX_ROW_TILE)
        if n_tiles_pref >= 2 and n_tiles_pref % 2 == 1:
            n_tiles_pref += 1
        row_tile = _round_up(_cdiv(rows, n_tiles_pref), 8)
        row_tile = max(8, min(row_tile, MAX_ROW_TILE, (rows // 8) * 8))
        tiles = _cdiv(rows, row_tile)

        if tiles >= 2 and tiles % 2 == 0:
            n_outer, n_inner = 2, tiles // 2     # byte-balanced halves, no phantoms
        else:
            n_outer, n_inner = 1, tiles

        needs_mask = (tiles * row_tile != rows)   # only the last tile is partial

        # Free view when n_valid % 128 == 0; otherwise a cheap prefix slice.
        x2 = x_flat[:n_main].reshape(rows, LANES)
        t2 = t_flat[:n_main].reshape(rows, LANES)

        kernel = functools.partial(
            _focal_sum_kernel, row_tile=row_tile, n_inner=n_inner, rows_valid=rows,
            needs_mask=needs_mask, gamma=float(gamma), eps=float(eps))

        def in_map(c, i):
            return (c * n_inner + i, 0)

        partials = pl.pallas_call(
            kernel,
            out_shape=jax.ShapeDtypeStruct((n_outer * 8, LANES), jnp.float32),
            grid_spec=pltpu.PrefetchScalarGridSpec(
                num_scalar_prefetch=0,
                grid=(n_outer, n_inner),
                in_specs=[
                    pl.BlockSpec((row_tile, LANES), in_map),
                    pl.BlockSpec((row_tile, LANES), in_map),
                ],
                out_specs=pl.BlockSpec((8, LANES), lambda c, i: (c, 0)),
            ),
            compiler_params=pltpu.CompilerParams(
                dimension_semantics=("parallel", "arbitrary"),
                vmem_limit_bytes=32 * 1024 * 1024),
        )(x2, t2)

        total = total + jnp.sum(partials)   # tiny (<= 16x128) final reduce
        tail_start = n_main

    if tail_start < n_valid:
        # <128-element ragged remainder (or a tiny <1024-element input): a few plain
        # XLA ops are cheaper than padding both streams through HBM.
        xt = x_flat[tail_start:].astype(jnp.float32)
        tt = t_flat[tail_start:].astype(jnp.float32)
        prob = jax.nn.sigmoid(xt)
        one_m_p = 1.0 - prob
        focal_t = -(tt * jnp.log(prob + eps) * one_m_p ** gamma
                    + (1.0 - tt) * jnp.log(one_m_p + eps) * prob ** gamma)
        total = total + jnp.sum(focal_t)

    if reduction == "mean":
        return total / n_valid
    return total


def _reference(logits, targets, gamma=2.0, eps=1e-10):
    x = logits.astype(jnp.float32)
    t = targets.astype(jnp.float32)
    log_sig = jax.nn.log_sigmoid(x)
    prob = jnp.exp(log_sig)
    focal = -(t * jnp.log(prob + eps) * (1.0 - prob) ** gamma
              + (1.0 - t) * jnp.log(1.0 - prob + eps) * prob ** gamma)
    return jnp.mean(focal)


if __name__ == "__main__":
    key = jax.random.PRNGKey(0)
    k1, k2, k3, k4 = jax.random.split(key, 4)

    # NCHW-shaped logits, binary targets (segmentation-style use); 128-aligned size.
    x = jax.random.normal(k1, (2, 4, 16, 16), dtype=jnp.float32) * 2.0
    tgt = (jax.random.uniform(k2, (2, 4, 16, 16)) > 0.5).astype(jnp.float32)
    loss = jax.block_until_ready(binary_focal_loss(x, tgt, gamma=2.0,
                                                   reduction="mean", eps=1e-10))
    ref = _reference(x, tgt)
    assert jnp.allclose(loss, ref, rtol=1e-4, atol=1e-5), (loss, ref)

    # Ragged size: exercises the masked partial edge tile + <128-element tail path.
    x2 = jax.random.normal(k3, (3, 5, 7, 11), dtype=jnp.float32) * 3.0
    t2 = (jax.random.uniform(k4, (3, 5, 7, 11)) > 0.5).astype(jnp.float32)
    loss2 = jax.block_until_ready(binary_focal_loss(x2, t2, gamma=2.0,
                                                    reduction="mean", eps=1e-10))
    ref2 = _reference(x2, t2)
    assert jnp.allclose(loss2, ref2, rtol=1e-4, atol=1e-5), (loss2, ref2)

    print("KERNEL_OK")
</pallas_src>

<mosaic_0001>
module attributes {stable_mosaic.version = 11 : i64} {
  func.func @_focal_sum_kernel(%arg0: i32, %arg1: i32, %arg2: memref<16x128xf32, #tpu.memory_space<vmem>>, %arg3: memref<16x128xf32, #tpu.memory_space<vmem>>, %arg4: memref<8x128xf32, #tpu.memory_space<vmem>>) attributes {dimension_semantics = [#tpu.dimension_semantics<parallel>, #tpu.dimension_semantics<arbitrary>], iteration_bounds = array<i64: 1, 1>, scalar_prefetch = 0 : i64, scratch_operands = 0 : i64, tpu.core_type = #tpu.core_type<tc>, window_params = [{transform_indices = @transform_0, window_bounds = array<i64: 16, 128>}, {transform_indices = @transform_1, window_bounds = array<i64: 16, 128>}, {transform_indices = @transform_2, window_bounds = array<i64: 8, 128>}]} {
    %c0_i32 = arith.constant 0 : i32
    %0 = arith.cmpi eq, %arg1, %c0_i32 : i32
    %1 = arith.extui %0 : i1 to i32
    %c0_i32_0 = arith.constant 0 : i32
    %2 = arith.cmpi ne, %1, %c0_i32_0 : i32
    scf.if %2 {
      %cst_14 = arith.constant 0.000000e+00 : f32
      %34 = vector.broadcast %cst_14 : f32 to vector<8x128xf32>
      %c0_15 = arith.constant 0 : index
      %c0_16 = arith.constant 0 : index
      %35 = vector.load %arg4[%c0_15, %c0_16] : memref<8x128xf32, #tpu.memory_space<vmem>>, vector<8x128xf32>
      tpu.vector_store %arg4[%c0_15, %c0_16], %34 {strides = array<i32>} : memref<8x128xf32, #tpu.memory_space<vmem>>, vector<8x128xf32>,
    } else {
    }
    %c0 = arith.constant 0 : index
    %c0_1 = arith.constant 0 : index
    %3 = vector.load %arg2[%c0, %c0_1] : memref<16x128xf32, #tpu.memory_space<vmem>>, vector<16x128xf32>
    %c0_2 = arith.constant 0 : index
    %c0_3 = arith.constant 0 : index
    %4 = vector.load %arg3[%c0_2, %c0_3] : memref<16x128xf32, #tpu.memory_space<vmem>>, vector<16x128xf32>
    %5 = arith.negf %3 : vector<16x128xf32>
    %6 = math.exp %5 : vector<16x128xf32>
    %cst = arith.constant 1.000000e+00 : f32
    %7 = vector.broadcast %cst : f32 to vector<16x128xf32>
    %8 = arith.addf %7, %6 : vector<16x128xf32>
    %9 = arith.divf %7, %8 : vector<16x128xf32>
    %cst_4 = arith.constant 1.000000e+00 : f32
    %10 = vector.broadcast %cst_4 : f32 to vector<16x128xf32>
    %11 = arith.subf %10, %9 : vector<16x128xf32>
    %12 = arith.mulf %11, %11 : vector<16x128xf32>
    %13 = arith.mulf %9, %9 : vector<16x128xf32>
    %cst_5 = arith.constant 1.000000e-10 : f32
    %14 = vector.broadcast %cst_5 : f32 to vector<16x128xf32>
    %15 = arith.addf %9, %14 : vector<16x128xf32>
    %16 = math.log %15 : vector<16x128xf32>
    %17 = arith.mulf %4, %16 : vector<16x128xf32>
    %18 = arith.mulf %17, %12 : vector<16x128xf32>
    %cst_6 = arith.constant 1.000000e+00 : f32
    %19 = vector.broadcast %cst_6 : f32 to vector<16x128xf32>
    %20 = arith.subf %19, %4 : vector<16x128xf32>
    %cst_7 = arith.constant 1.000000e-10 : f32
    %21 = vector.broadcast %cst_7 : f32 to vector<16x128xf32>
    %22 = arith.addf %11, %21 : vector<16x128xf32>
    %23 = math.log %22 : vector<16x128xf32>
    %24 = arith.mulf %20, %23 : vector<16x128xf32>
    %25 = arith.mulf %24, %13 : vector<16x128xf32>
    %26 = arith.addf %18, %25 : vector<16x128xf32>
    %cst_8 = arith.constant 0.000000e+00 : f32
    %27 = vector.broadcast %cst_8 : f32 to vector<16x128xf32>
    %28 = arith.subf %27, %26 : vector<16x128xf32>
    %c0_9 = arith.constant 0 : index
    %c0_10 = arith.constant 0 : index
    %29 = vector.load %arg4[%c0_9, %c0_10] : memref<8x128xf32, #tpu.memory_space<vmem>>, vector<1x128xf32>
    %cst_11 = arith.constant dense<0.000000e+00> : vector<128xf32>
    %30 = vector.multi_reduction <add>, %28, %cst_11 [0] : vector<16x128xf32> to vector<128xf32>
    %31 = vector.shape_cast %30 : vector<128xf32> to vector<1x128xf32>
    %32 = arith.addf %29, %31 : vector<1x128xf32>
    %c0_12 = arith.constant 0 : index
    %c0_13 = arith.constant 0 : index
    %33 = vector.load %arg4[%c0_12, %c0_13] : memref<8x128xf32, #tpu.memory_space<vmem>>, vector<1x128xf32>
    tpu.vector_store %arg4[%c0_12, %c0_13], %32 {strides = array<i32>} : memref<8x128xf32, #tpu.memory_space<vmem>>, vector<1x128xf32>,
    return
  }
  func.func @transform_0(%arg0: i32, %arg1: i32) -> (i32, i32) {
    %c1_i32 = arith.constant 1 : i32
    %0 = arith.muli %arg0, %c1_i32 : i32
    %1 = arith.addi %0, %arg1 : i32
    %c0_i32 = arith.constant 0 : i32
    %c0_i32_0 = arith.constant 0 : i32
    return %1, %c0_i32 : i32, i32
  }
  func.func @transform_1(%arg0: i32, %arg1: i32) -> (i32, i32) {
    %c1_i32 = arith.constant 1 : i32
    %0 = arith.muli %arg0, %c1_i32 : i32
    %1 = arith.addi %0, %arg1 : i32
    %c0_i32 = arith.constant 0 : i32
    %c0_i32_0 = arith.constant 0 : i32
    return %1, %c0_i32 : i32, i32
  }
  func.func @transform_2(%arg0: i32, %arg1: i32) -> (i32, i32) {
    %c0_i32 = arith.constant 0 : i32
    %c0_i32_0 = arith.constant 0 : i32
    return %arg0, %c0_i32 : i32, i32
  }
}

</mosaic_0001>

<llo_original>
// kernel: tpu_custom_call.1
$region0: #{tpu_custom_call.1}
  #allocation0 [shape = 'u32[]', space=smem, size = 0x4, offset = 0x4, fixed_abs, tag = 'smem constant byte address 0x4 - core index']
  #allocation1 [shape = 'u32[144,128]{1,0:T(1,128)}', space=vmem, size = 0x12000, scoped, tag = 'internal scratch']
  %s0 = inlined_call_operand.hbm [shape: f32[16,128], index: 0, kind: input, shape index: {}]
  %s1 = inlined_call_operand.hbm [shape: f32[16,128], index: 1, kind: input, shape index: {}]
  %s2 = inlined_call_operand.hbm [shape: f32[8,128], index: 2, kind: output, shape index: {}]
  %s3 = sld [smem:[#allocation0]]
  $region30: #{tpu_custom_call.1} parent=0
    _
  %s5 = ssub.s32 1, %s3
  %s6 = scalar_select 0, %s5, %s3
  $region1: #{tpu_custom_call.1} parent=0
    #allocation2 [shape = 'u8[8192]{0}', space=vmem, size = 0x2000, scoped, tag = 'input window, operand 0, single buffered']
    #allocation3 [shape = 's32[1]{0}', space=sflag, size = 0x4, scoped, tag = 'scoped memory for tpu_custom_call.1']
    #allocation4 [shape = 's32[1]{0}', space=sflag, size = 0x4, scoped, tag = 'scoped memory for tpu_custom_call.1']
    #allocation5 [shape = 'u8[8192]{0}', space=vmem, size = 0x2000, scoped, tag = 'input window, operand 1, single buffered']
    #allocation6 [shape = 's32[1]{0}', space=sflag, size = 0x4, scoped, tag = 'scoped memory for tpu_custom_call.1']
    #allocation7 [shape = 'u8[4096]{0}', space=vmem, size = 0x1000, scoped, tag = 'output window, operand 0, single buffered']
    %7 = vsyncpa [#allocation3], 0
    %8 = vsyncpa [#allocation6], 0
    %9 = vsyncpa [#allocation4], 0
    // Predicated region
    $region2: #{tpu_custom_call.1} parent=1 // pred_check
      _
    $region3: #{tpu_custom_call.1} parent=1 // pred_check_branch
      %11 = sbr.rel (0) target = $region5
    $region4: #{tpu_custom_call.1} parent=1 // pred_region
      %s12 = sadd.s32 0, 0
      %s13 = smul.u32 2, %s12
      %s15 = ssub.s32 256, 256
      %16 = vsyncadd [#allocation3], %s15
      %s17 = smul.addr %s13, 128
      %s18 = scalar_lea.hbm %s0, %s17
      %s19 = sshll.u32 [#allocation2], 4
      %s20 = int_to_ptr.vmem [resolvable:$true] %s19
      %25 = dma.hbm_to_vmem [thread:$0]  %s18, 256, %s20, [#allocation3], 128, 128, 8
    $region5: #{tpu_custom_call.1} parent=1 // pred_fallthru
      _
    // Predicated region
    $region6: #{tpu_custom_call.1} parent=1 // pred_check
      _
    $region7: #{tpu_custom_call.1} parent=1 // pred_check_branch
      %27 = sbr.rel (0) target = $region9
    $region8: #{tpu_custom_call.1} parent=1 // pred_region
      %s28 = sadd.s32 0, 0
      %s29 = smul.u32 2, %s28
      %s31 = ssub.s32 256, 256
      %32 = vsyncadd [#allocation6], %s31
      %s33 = smul.addr %s29, 128
      %s34 = scalar_lea.hbm %s1, %s33
      %s35 = sshll.u32 [#allocation5], 4
      %s36 = int_to_ptr.vmem [resolvable:$true] %s35
      %41 = dma.hbm_to_vmem [thread:$0]  %s34, 256, %s36, [#allocation6], 128, 128, 8
    $region9: #{tpu_custom_call.1} parent=1 // pred_fallthru
      _
    // Predicated region
    $region10: #{tpu_custom_call.1} parent=1 // pred_check
      _
    $region11: #{tpu_custom_call.1} parent=1 // pred_check_branch
      %43 = sbr.rel (0) target = $region13
    $region12: #{tpu_custom_call.1} parent=1 // pred_region
      %44 = dma.done [#allocation3], 256
    $region13: #{tpu_custom_call.1} parent=1 // pred_fallthru
      _
    // Predicated region
    $region14: #{tpu_custom_call.1} parent=1 // pred_check
      _
    $region15: #{tpu_custom_call.1} parent=1 // pred_check_branch
      %46 = sbr.rel (0) target = $region17
    $region16: #{tpu_custom_call.1} parent=1 // pred_region
      %47 = dma.done [#allocation6], 256
    $region17: #{tpu_custom_call.1} parent=1 // pred_fallthru
      _
    %s48 = sadd.s32 0, 0
    %s49 = smul.u32 2, %s48
    %s50 = sadd.s32 0, 0
    %s51 = smul.u32 2, %s50
    %p52 = scmp.eq.s32.totalorder 0, 0
    // Predicated region
    $region18: #{tpu_custom_call.1} parent=1 // pred_check
      %p53 = pneg %p52
    $region19: #{tpu_custom_call.1} parent=1 // pred_check_branch
      %55 = sbr.rel (%p53) target = $region21
    $region20: #{tpu_custom_call.1} parent=1 // pred_region
      %56 = vst [vmem:[#allocation7] sm:$0xff] 0.0
    $region21: #{tpu_custom_call.1} parent=1 // pred_fallthru
      _
    %v57 = vld [vmem:[#allocation2] sm:$0xff]
    %v58 = vld [vmem:[#allocation2 + $0x8] sm:$0xff]
    %v59 = vld [vmem:[#allocation5] sm:$0xff]
    %v60 = vld [vmem:[#allocation5 + $0x8] sm:$0xff]
    %v61 = vxor.u32 %v57, 2147483648
    %v62 = vxor.u32 %v58, 2147483648
    %v63 = vmul.f32 %v61, 1.442695
    %v64 = vpow.pop %v63
    %v65 = vmul.f32 %v62, 1.442695
    %v66 = vpow.pop %v65
    %v67 = vadd.f32 %v64, 1.0
    %v68 = vadd.f32 %v66, 1.0
    %v69 = vrcp.pop %v67
    %v70 = vmul.f32 1.0, %v69
    %v71 = vrcp.pop %v68
    %v72 = vmul.f32 1.0, %v71
    %v73 = vsub.f32 1.0, %v70
    %v74 = vsub.f32 1.0, %v72
    %v75 = vmul.f32 %v73, %v73
    %v76 = vmul.f32 %v74, %v74
    %v77 = vmul.f32 %v70, %v70
    %v78 = vmul.f32 %v72, %v72
    %v79 = vadd.f32 %v70, 1e-10
    %v80 = vadd.f32 %v72, 1e-10
    %v81 = vlog2.pop %v79
    %v82 = vmul.f32 %v81, 0.6931472
    %v83 = vlog2.pop %v80
    %v84 = vmul.f32 %v83, 0.6931472
    %v85 = vmul.f32 %v59, %v82
    %v86 = vmul.f32 %v60, %v84
    %v87 = vmul.f32 %v85, %v75
    %v88 = vmul.f32 %v86, %v76
    %v89 = vsub.f32 1.0, %v59
    %v90 = vsub.f32 1.0, %v60
    %v91 = vadd.f32 %v73, 1e-10
    %v92 = vadd.f32 %v74, 1e-10
    %v93 = vlog2.pop %v91
    %v94 = vmul.f32 %v93, 0.6931472
    %v95 = vlog2.pop %v92
    %v96 = vmul.f32 %v95, 0.6931472
    %v97 = vmul.f32 %v89, %v94
    %v98 = vmul.f32 %v90, %v96
    %v99 = vmul.f32 %v97, %v77
    %v100 = vmul.f32 %v98, %v78
    %v101 = vadd.f32 %v87, %v99
    %v102 = vadd.f32 %v88, %v100
    %v103 = vsub.f32 0.0, %v101
    %v104 = vsub.f32 0.0, %v102
    %v105 = vld [vmem:[#allocation7] sm:$0x1]
    %v106 = vadd.f32 %v103, %v104
    %v107 = vrot.slane %v106, 4
    %v108 = vadd.f32 %v106, %v107
    %v109 = vrot.slane %v108, 2
    %v110 = vadd.f32 %v108, %v109
    %v111 = vrot.slane %v110, 1
    %v112 = vadd.f32 %v110, %v111
    %v113 = vadd.f32 %v105, %v112
    %114 = vst [vmem:[#allocation7] sm:$0x1] %v113
    // Predicated region
    $region22: #{tpu_custom_call.1} parent=1 // pred_check
      _
    $region23: #{tpu_custom_call.1} parent=1 // pred_check_branch
      %116 = sbr.rel (0) target = $region25
    $region24: #{tpu_custom_call.1} parent=1 // pred_region
      %s118 = ssub.s32 128, 128
      %119 = vsyncadd [#allocation4], %s118
      %s121 = sshll.u32 [#allocation7], 4
      %s122 = int_to_ptr.vmem [resolvable:$true] %s121
      %124 = dma.vmem_to_hbm [thread:$0]  %s122, 128, %s2, [#allocation4]
    $region25: #{tpu_custom_call.1} parent=1 // pred_fallthru
      _
    // Predicated region
    $region26: #{tpu_custom_call.1} parent=1 // pred_check
      _
    $region27: #{tpu_custom_call.1} parent=1 // pred_check_branch
      %126 = sbr.rel (0) target = $region29
    $region28: #{tpu_custom_call.1} parent=1 // pred_region
      %127 = dma.done [#allocation4], 128
    $region29: #{tpu_custom_call.1} parent=1 // pred_fallthru
      _
    %128 = vsyncpa [#allocation3], 1
    %129 = vsyncpa [#allocation6], 1
    %130 = vsyncpa [#allocation4], 1

</llo_original>
